<compile_context>
chip_gen: v7x
topology: tpu7x:2x2x1
jax: 0.10.0
libtpu: 0.0.40
codegen_flags: <defaults>
</compile_context>

<pallas_src>
import jax
import jax.numpy as jnp
from jax import lax
from jax.experimental import pallas as pl
from jax.experimental.pallas import tpu as pltpu


def _gconv_kernel(a_ref, x_ref, o_ref):
    # a_ref: (W, K)   pre-transposed adjacency, resident in VMEM
    # x_ref: (TB, K, TL)  native-layout input slab (L on lanes, K on sublanes)
    # o_ref: (TB, W, TL)  native-layout output slab
    a = a_ref[...]
    tb = x_ref.shape[0]

    def one_row(b):
        o_ref[b] = jnp.dot(
            a, x_ref[b], preferred_element_type=jnp.float32
        ).astype(o_ref.dtype)

    if tb <= 8:
        # Small static trip count -> full unroll (LLO scheduler visibility).
        for b in range(tb):
            one_row(b)
    else:
        # Larger TB -> rolled loop; per-iter overhead is hidden behind the
        # matmul + HBM DMA (the op is bandwidth bound).
        def body(b, carry):
            one_row(b)
            return carry

        lax.fori_loop(0, tb, body, 0)


def _gconv_batched(x3, A, out_dtype, *, target_tile_bytes=2 << 20):
    """out[m, w, l] = sum_k x3[m, k, l] * A[k, w].

    x3: (BATCH, K, L), A: (K, W) -> out: (BATCH, W, L).
    """
    BATCH, K, L = x3.shape
    K2, W = A.shape
    assert K == K2, "contraction dim mismatch"

    A_t = A.T  # (W, K): tiny one-time transpose outside the kernel
    itemsize = jnp.dtype(x3.dtype).itemsize

    # Lane tile: full L when modest (full-dim blocks are exempt from the
    # 128-lane rule); otherwise a 128-multiple tile, tail handled by Pallas
    # block masking (no padding materialized).
    TL = L if L <= 2048 else 1024
    n_l = pl.cdiv(L, TL)

    # Batch tile: ~target_tile_bytes per x block, but capped so the grid has
    # at least ~4 steps (DMA/compute/writeback overlap) when there is enough
    # work to split.
    per_b = max(1, K * TL * itemsize)
    TB = max(1, target_tile_bytes // per_b)
    min_steps = 4
    want_b_steps = max(1, -(-min_steps // n_l))      # ceil(min_steps / n_l)
    if BATCH >= want_b_steps:
        TB = min(TB, -(-BATCH // want_b_steps))      # ceil(BATCH / want_b_steps)
    TB = int(min(TB, BATCH))
    n_b = pl.cdiv(BATCH, TB)

    grid = (n_b, n_l)

    # Double-buffered x/out blocks + resident A, with ~2x margin; tight enough
    # to leave scoped-VMEM headroom for surrounding fusions on v7x.
    need = (2 * TB * (K + W) * TL + 2 * W * K) * itemsize
    vmem_limit = int(min(max(2 * need, 8 * 2**20), 48 * 2**20))

    flops = 2 * BATCH * K * W * L
    bytes_accessed = (BATCH * K * L + K * W + BATCH * W * L) * itemsize

    out = pl.pallas_call(
        _gconv_kernel,
        out_shape=jax.ShapeDtypeStruct((BATCH, W, L), out_dtype),
        grid_spec=pltpu.PrefetchScalarGridSpec(
            num_scalar_prefetch=0,
            grid=grid,
            in_specs=[
                # A: constant index_map -> fetched once, resident across grid.
                pl.BlockSpec((W, K), lambda i, j: (0, 0)),
                # x: native layout, lane-dense last dim (full L or 128-mult).
                pl.BlockSpec((TB, K, TL), lambda i, j: (i, 0, j)),
            ],
            out_specs=pl.BlockSpec((TB, W, TL), lambda i, j: (i, 0, j)),
        ),
        compiler_params=pltpu.CompilerParams(
            dimension_semantics=("parallel", "parallel"),
            vmem_limit_bytes=vmem_limit,
        ),
        cost_estimate=pl.CostEstimate(
            flops=int(flops),
            transcendentals=0,
            bytes_accessed=int(bytes_accessed),
        ),
    )(A_t, x3)
    return out


def gconv(x, A, *, cast_to_bf16=False):
    """JAX/Pallas equivalent of the PyTorch gconv.forward.

    cast_to_bf16=True halves HBM read traffic (op is bandwidth-bound) at the
    cost of bf16 input rounding; accumulation is f32 and the output keeps the
    original result dtype either way.
    """
    out_dtype = jnp.result_type(x.dtype, A.dtype)
    if cast_to_bf16:
        x = x.astype(jnp.bfloat16)
        A = A.astype(jnp.bfloat16)

    if x.ndim == 4:
        # 'bcnl,nw->bcwl': contract n.  (B,C) collapse is a free reshape.
        B, C, N, L = x.shape
        K, W = A.shape
        assert K == N, "A rows must match the node dim of x"
        x3 = x.reshape(B * C, N, L)
        out3 = _gconv_batched(x3, A, out_dtype)       # (B*C, W, L)
        return out3.reshape(B, C, W, L)
    elif x.ndim == 3:
        # 'ncl,cw->nwl': contract c.  Already in (batch, contract, lane) form.
        N, C, L = x.shape
        K, W = A.shape
        assert K == C, "A rows must match the channel dim of x"
        return _gconv_batched(x, A, out_dtype)        # (N, W, L)
    else:
        raise ValueError(f"unsupported rank {x.ndim}")


if __name__ == "__main__":
    key = jax.random.PRNGKey(0)
    k1, k2, k3, k4, k5, k6, k7, k8 = jax.random.split(key, 8)

    # ---- 4D small: x (B, C, N, L), A (N, W); exercises unrolled loop ----
    B, C, N, L, W = 2, 4, 16, 16, 16
    x4 = jax.random.normal(k1, (B, C, N, L), dtype=jnp.float32)
    A4 = jax.random.normal(k2, (N, W), dtype=jnp.float32)
    out4 = jax.block_until_ready(gconv(x4, A4))
    ref4 = jnp.einsum('bcnl,nw->bcwl', x4, A4)
    assert out4.shape == (B, C, W, L)
    assert out4.dtype == ref4.dtype
    assert jnp.allclose(out4, ref4, atol=1e-4, rtol=1e-4), "4D mismatch"

    # ---- 3D small: x (N, C, L), A (C, W) ----
    Nb, Cc, Ll, Ww = 2, 16, 16, 16
    x3 = jax.random.normal(k3, (Nb, Cc, Ll), dtype=jnp.float32)
    A3 = jax.random.normal(k4, (Cc, Ww), dtype=jnp.float32)
    out3 = jax.block_until_ready(gconv(x3, A3))
    ref3 = jnp.einsum('ncl,cw->nwl', x3, A3)
    assert out3.shape == (Nb, Ww, Ll)
    assert jnp.allclose(out3, ref3, atol=1e-4, rtol=1e-4), "3D mismatch"

    # ---- 4D, non-square A + non-divisible batch tiling (masked tail) ----
    Bt, Ct, Nt, Lt, Wt = 3, 5, 20, 160, 24        # BATCH = 15 -> tail block
    xt = jax.random.normal(k5, (Bt, Ct, Nt, Lt), dtype=jnp.float32)
    At = jax.random.normal(k6, (Nt, Wt), dtype=jnp.float32)
    outt = jax.block_until_ready(gconv(xt, At))
    reft = jnp.einsum('bcnl,nw->bcwl', xt, At)
    assert outt.shape == (Bt, Ct, Wt, Lt)
    assert jnp.allclose(outt, reft, atol=1e-3, rtol=1e-3), "tail-tiled 4D mismatch"

    # ---- 4D, larger batch -> multi-step grid + fori_loop path ----
    Bg, Cg, Ng, Lg = 4, 32, 20, 160               # BATCH = 128, TB > 8
    xg = jax.random.normal(k7, (Bg, Cg, Ng, Lg), dtype=jnp.float32)
    Ag = jax.random.normal(k8, (Ng, Ng), dtype=jnp.float32)
    outg = jax.block_until_ready(gconv(xg, Ag))
    refg = jnp.einsum('bcnl,nw->bcwl', xg, Ag)
    assert outg.shape == (Bg, Cg, Ng, Lg)
    assert jnp.allclose(outg, refg, atol=1e-3, rtol=1e-3), "multi-step 4D mismatch"

    print("KERNEL_OK")
</pallas_src>

<mosaic_0001>
module attributes {stable_mosaic.version = 11 : i64} {
  func.func @_gconv_kernel(%arg0: i32, %arg1: i32, %arg2: memref<16x16xf32, #tpu.memory_space<vmem>>, %arg3: memref<2x16x16xf32, #tpu.memory_space<vmem>>, %arg4: memref<2x16x16xf32, #tpu.memory_space<vmem>>) attributes {dimension_semantics = [#tpu.dimension_semantics<parallel>, #tpu.dimension_semantics<parallel>], iteration_bounds = array<i64: 4, 1>, scalar_prefetch = 0 : i64, scratch_operands = 0 : i64, tpu.core_type = #tpu.core_type<tc>, window_params = [{pipeline_mode = #tpu.pipeline_mode<synchronous>, transform_indices = @transform_0, window_bounds = array<i64: 16, 16>}, {transform_indices = @transform_1, window_bounds = array<i64: 2, 16, 16>}, {transform_indices = @transform_2, window_bounds = array<i64: 2, 16, 16>}]} {
    %c0 = arith.constant 0 : index
    %c0_0 = arith.constant 0 : index
    %0 = vector.load %arg2[%c0, %c0_0] : memref<16x16xf32, #tpu.memory_space<vmem>>, vector<16x16xf32>
    %c0_1 = arith.constant 0 : index
    %c0_2 = arith.constant 0 : index
    %c0_3 = arith.constant 0 : index
    %1 = vector.load %arg3[%c0_1, %c0_2, %c0_3] : memref<2x16x16xf32, #tpu.memory_space<vmem>>, vector<1x16x16xf32>
    %2 = vector.shape_cast %1 : vector<1x16x16xf32> to vector<16x16xf32>
    %cst = arith.constant dense<0.000000e+00> : vector<16x16xf32>
    %3 = tpu.matmul %0, %2, %cst {dimension_numbers = #tpu.dot_dimension_numbers<[1], [0], [0], [1], [0, 0, 1, 1], [], []>} : vector<16x16xf32>, vector<16x16xf32>, vector<16x16xf32> -> vector<16x16xf32>
    %c0_4 = arith.constant 0 : index
    %c0_5 = arith.constant 0 : index
    %c0_6 = arith.constant 0 : index
    %4 = vector.load %arg4[%c0_4, %c0_5, %c0_6] : memref<2x16x16xf32, #tpu.memory_space<vmem>>, vector<1x16x16xf32>
    %5 = vector.shape_cast %4 : vector<1x16x16xf32> to vector<16x16xf32>
    %6 = vector.shape_cast %3 : vector<16x16xf32> to vector<1x16x16xf32>
    tpu.vector_store %arg4[%c0_4, %c0_5, %c0_6], %6 {strides = array<i32>} : memref<2x16x16xf32, #tpu.memory_space<vmem>>, vector<1x16x16xf32>,
    %c1 = arith.constant 1 : index
    %c0_7 = arith.constant 0 : index
    %c0_8 = arith.constant 0 : index
    %7 = vector.load %arg3[%c1, %c0_7, %c0_8] : memref<2x16x16xf32, #tpu.memory_space<vmem>>, vector<1x16x16xf32>
    %8 = vector.shape_cast %7 : vector<1x16x16xf32> to vector<16x16xf32>
    %cst_9 = arith.constant dense<0.000000e+00> : vector<16x16xf32>
    %9 = tpu.matmul %0, %8, %cst_9 {dimension_numbers = #tpu.dot_dimension_numbers<[1], [0], [0], [1], [0, 0, 1, 1], [], []>} : vector<16x16xf32>, vector<16x16xf32>, vector<16x16xf32> -> vector<16x16xf32>
    %c1_10 = arith.constant 1 : index
    %c0_11 = arith.constant 0 : index
    %c0_12 = arith.constant 0 : index
    %10 = vector.load %arg4[%c1_10, %c0_11, %c0_12] : memref<2x16x16xf32, #tpu.memory_space<vmem>>, vector<1x16x16xf32>
    %11 = vector.shape_cast %10 : vector<1x16x16xf32> to vector<16x16xf32>
    %12 = vector.shape_cast %9 : vector<16x16xf32> to vector<1x16x16xf32>
    tpu.vector_store %arg4[%c1_10, %c0_11, %c0_12], %12 {strides = array<i32>} : memref<2x16x16xf32, #tpu.memory_space<vmem>>, vector<1x16x16xf32>,
    return
  }
  func.func @transform_0(%arg0: i32, %arg1: i32) -> (i32, i32) {
    %c0_i32 = arith.constant 0 : i32
    %c0_i32_0 = arith.constant 0 : i32
    %c0_i32_1 = arith.constant 0 : i32
    return %c0_i32, %c0_i32_0 : i32, i32
  }
  func.func @transform_1(%arg0: i32, %arg1: i32) -> (i32, i32, i32) {
    %c0_i32 = arith.constant 0 : i32
    %c0_i32_0 = arith.constant 0 : i32
    return %arg0, %c0_i32, %arg1 : i32, i32, i32
  }
  func.func @transform_2(%arg0: i32, %arg1: i32) -> (i32, i32, i32) {
    %c0_i32 = arith.constant 0 : i32
    %c0_i32_0 = arith.constant 0 : i32
    return %arg0, %c0_i32, %arg1 : i32, i32, i32
  }
}

</mosaic_0001>

<llo_original>
// kernel: tpu_custom_call.1
$region0: #{tpu_custom_call.1}
  #allocation0 [shape = 'u32[]', space=smem, size = 0x4, offset = 0x4, fixed_abs, tag = 'smem constant byte address 0x4 - core index']
  #allocation1 [shape = 'u32[144,128]{1,0:T(1,128)}', space=vmem, size = 0x12000, scoped, tag = 'internal scratch']
  %s0 = inlined_call_operand.hbm [shape: f32[16,16], index: 0, kind: input, shape index: {}]
  %s1 = inlined_call_operand.hbm [shape: f32[8,16,16], index: 1, kind: input, shape index: {}]
  %s2 = inlined_call_operand.hbm [shape: f32[8,16,16], index: 2, kind: output, shape index: {}]
  %s3 = sld [smem:[#allocation0]]
  $region49: #{tpu_custom_call.1} parent=0
    _
  %s5 = ssub.s32 1, %s3
  %s6 = scalar_select 0, %s5, %s3
  $region1: #{tpu_custom_call.1} parent=0
    #allocation2 [shape = 'u8[8192]{0}', space=vmem, size = 0x2000, scoped, tag = 'input window, operand 0, single buffered']
    #allocation3 [shape = 's32[2]{0}', space=sflag, size = 0x8, scoped, tag = 'scoped memory for tpu_custom_call.1']
    #allocation4 [shape = 's32[2]{0}', space=sflag, size = 0x8, scoped, tag = 'scoped memory for tpu_custom_call.1']
    #allocation5 [shape = 'u8[32768]{0}', space=vmem, size = 0x8000, scoped, tag = 'input window, operand 1']
    #allocation6 [shape = 's32[2]{0}', space=sflag, size = 0x8, scoped, tag = 'scoped memory for tpu_custom_call.1']
    #allocation7 [shape = 'u8[32768]{0}', space=vmem, size = 0x8000, scoped, tag = 'output window, operand 0']
    %7 = vsyncpa [#allocation3], 0
    %8 = vsyncpa [#allocation6], 0
    %s9 = scalar_lea.sflag [#allocation6], 1
    %10 = vsyncpa %s9, 0
    %11 = vsyncpa [#allocation4], 0
    %s12 = scalar_lea.sflag [#allocation4], 1
    %13 = vsyncpa %s12, 0
    loop: start=0, step=1, limit=6
    $region2: #{tpu_custom_call.1} parent=1 // loop_pre_header
      _
    $region3: #{tpu_custom_call.1} parent=1 // loop_header
      %s15 = sphi 0, %s19
      %p16 = scmp.ge.s32.totalorder %s15, 6
      %s22 = sphi 0, %s34
      %s23 = sphi 0, %s30
      %s24 = sphi 0, %s22
      %s25 = sphi 0, %s23
      %s26 = sphi 0, %s24
      %s27 = sphi 0, %s25
      %s35 = sphi 0, %s35
      %s37 = sphi 0, %s35
      %s38 = sphi 0, %s37
      %s52 = sphi 0, %s38
      %s60 = sphi 0, %s62
      %s63 = sphi 0, %s60
      %s64 = sphi 0, %s63
      %s80 = sphi 0, %s64
      %s88 = sphi 0, %s90
      %s91 = sphi 0, %s88
      %s92 = sphi 0, %s91
      %s108 = sphi 0, %s92
    $region4: #{tpu_custom_call.1} parent=1 // loop_header_branch
      %18 = sbr.rel (%p16) target = $region8
    $region5: #{tpu_custom_call.1} parent=1 // loop_body
      %s20 = ssub.s32 %s15, 1
      %s21 = ssub.s32 %s15, 2
      %s28 = sadd.s32 1, %s23
      %p29 = scmp.ge.s32.totalorder %s28, 1
      %s30 = scalar_select %p29, 0, %s28
      %s31 = sadd.s32 1, %s22
      %s32 = scalar_select %p29, %s31, %s22
      %p33 = scmp.ge.s32.totalorder %s32, 4
      %s34 = scalar_select %p33, 0, %s32
      %s36 = sadd.s32 %s35, 1
      %p39 = scmp.eq.s32.totalorder %s15, 3
      %p40 = scmp.ne.s32.totalorder %s35, %s37
      %p41 = scmp.eq.s32.totalorder %s15, 0
      %p42 = por %p40, %p41
      %p43 = scmp.ne.s32.totalorder %s35, %s37
      %p44 = scmp.eq.s32.totalorder %s20, 3
      %p45 = por %p43, %p44
      %p46 = scmp.ne.s32.totalorder %s37, %s38
      %p47 = scmp.eq.s32.totalorder %s20, 0
      %p48 = por %p46, %p47
      %p49 = scmp.ne.s32.totalorder %s37, %s38
      %p50 = scmp.eq.s32.totalorder %s21, 3
      %p51 = por %p49, %p50
      %p53 = scmp.ne.s32.totalorder %s38, %s52
      %p54 = scmp.eq.s32.totalorder %s21, 0
      %p55 = por %p53, %p54
      %s56 = ssub.s32 %s22, %s34
      %s57 = ssub.s32 %s23, %s30
      %s58 = sor.u32 %s56, %s57
      %p59 = scmp.eq.s32.totalorder %s58, 0
      %s61 = sadd.s32 %s60, 1
      %s62 = scalar_select %p59, %s60, %s61
      %p65 = pneg %p59
      %p66 = scmp.eq.s32.totalorder %s15, 3
      %p67 = por %p65, %p66
      %p68 = scmp.ne.s32.totalorder %s60, %s63
      %p69 = scmp.eq.s32.totalorder %s15, 0
      %p70 = por %p68, %p69
      %p71 = scmp.ne.s32.totalorder %s60, %s63
      %p72 = scmp.eq.s32.totalorder %s20, 3
      %p73 = por %p71, %p72
      %p74 = scmp.ne.s32.totalorder %s63, %s64
      %p75 = scmp.eq.s32.totalorder %s20, 0
      %p76 = por %p74, %p75
      %p77 = scmp.ne.s32.totalorder %s63, %s64
      %p78 = scmp.eq.s32.totalorder %s21, 3
      %p79 = por %p77, %p78
      %p81 = scmp.ne.s32.totalorder %s64, %s80
      %p82 = scmp.eq.s32.totalorder %s21, 0
      %p83 = por %p81, %p82
      %s84 = ssub.s32 %s22, %s34
      %s85 = ssub.s32 %s23, %s30
      %s86 = sor.u32 %s84, %s85
      %p87 = scmp.eq.s32.totalorder %s86, 0
      %s89 = sadd.s32 %s88, 1
      %s90 = scalar_select %p87, %s88, %s89
      %p93 = pneg %p87
      %p94 = scmp.eq.s32.totalorder %s15, 3
      %p95 = por %p93, %p94
      %p96 = scmp.ne.s32.totalorder %s88, %s91
      %p97 = scmp.eq.s32.totalorder %s15, 0
      %p98 = por %p96, %p97
      %p99 = scmp.ne.s32.totalorder %s88, %s91
      %p100 = scmp.eq.s32.totalorder %s20, 3
      %p101 = por %p99, %p100
      %p102 = scmp.ne.s32.totalorder %s91, %s92
      %p103 = scmp.eq.s32.totalorder %s20, 0
      %p104 = por %p102, %p103
      %p105 = scmp.ne.s32.totalorder %s91, %s92
      %p106 = scmp.eq.s32.totalorder %s21, 3
      %p107 = por %p105, %p106
      %p109 = scmp.ne.s32.totalorder %s92, %s108
      %p110 = scmp.eq.s32.totalorder %s21, 0
      %p111 = por %p109, %p110
      %p112 = scmp.le.s32.totalorder 1, %s15
      %p113 = scmp.lt.s32.totalorder %s15, 5
      %p114 = pnand %p112, %p113
      %p115 = pneg %p114
      // Predicated region
      $region9: #{tpu_custom_call.1} parent=5 // pred_check
        _
      $region10: #{tpu_custom_call.1} parent=5 // pred_check_branch
        %117 = sbr.rel (%p114) target = $region12
      $region11: #{tpu_custom_call.1} parent=5 // pred_region
        %s118 = ssub.s32 %s15, 1
        // Predicated region
        $region13: #{tpu_custom_call.1} parent=11 // pred_check
          %p119 = pneg %p48
        $region14: #{tpu_custom_call.1} parent=11 // pred_check_branch
          %121 = sbr.rel (%p119) target = $region16
        $region15: #{tpu_custom_call.1} parent=11 // pred_region
          %s123 = ssub.s32 256, 256
          %124 = vsyncadd [#allocation3], %s123
          %s125 = sshll.u32 [#allocation2], 4
          %s126 = int_to_ptr.vmem [resolvable:$true] %s125
          %131 = dma.hbm_to_vmem [thread:$0]  %s0, 256, %s126, [#allocation3], 128, 128, 8
        $region16: #{tpu_custom_call.1} parent=11 // pred_fallthru
          _
      $region12: #{tpu_custom_call.1} parent=5 // pred_fallthru
        _
      %p132 = scmp.lt.s32.totalorder %s15, 4
      // Predicated region
      $region17: #{tpu_custom_call.1} parent=5 // pred_check
        %p133 = pneg %p132
      $region18: #{tpu_custom_call.1} parent=5 // pred_check_branch
        %135 = sbr.rel (%p133) target = $region20
      $region19: #{tpu_custom_call.1} parent=5 // pred_region
        // Predicated region
        $region21: #{tpu_custom_call.1} parent=19 // pred_check
          %p136 = pneg %p70
        $region22: #{tpu_custom_call.1} parent=19 // pred_check_branch
          %138 = sbr.rel (%p136) target = $region24
        $region23: #{tpu_custom_call.1} parent=19 // pred_region
          %s139 = sand.u32 %s60, 1
          %s140 = scalar_lea.sflag [#allocation6], %s139
          %s141 = sand.u32 %s60, 1
          %s142 = smul.addr %s141, 32
          %s143 = scalar_lea.vmem [#allocation5], %s142
          %s144 = smul.u32 2, %s22
          %s146 = ssub.s32 512, 512
          %147 = vsyncadd %s140, %s146
          %s148 = smul.addr %s144, 2
          %s149 = sadd.s32 %s23, %s148
          %s150 = smul.addr %s149, 128
          %s151 = scalar_lea.hbm %s1, %s150
          %s152 = sshll.u32 %s143, 4
          %s153 = int_to_ptr.vmem [resolvable:$true] %s152
          %158 = dma.hbm_to_vmem [thread:$0]  %s151, 512, %s153, %s140, 128, 128, 8
        $region24: #{tpu_custom_call.1} parent=19 // pred_fallthru
          _
      $region20: #{tpu_custom_call.1} parent=5 // pred_fallthru
        _
      %p159 = scmp.le.s32.totalorder 1, %s15
      %p160 = scmp.lt.s32.totalorder %s15, 5
      %p161 = pnand %p159, %p160
      %p162 = pneg %p161
      // Predicated region
      $region25: #{tpu_custom_call.1} parent=5 // pred_check
        _
      $region26: #{tpu_custom_call.1} parent=5 // pred_check_branch
        %164 = sbr.rel (%p161) target = $region28
      $region27: #{tpu_custom_call.1} parent=5 // pred_region
        %s165 = ssub.s32 %s15, 1
        // Predicated region
        $region29: #{tpu_custom_call.1} parent=27 // pred_check
          %p166 = pneg %p48
        $region30: #{tpu_custom_call.1} parent=27 // pred_check_branch
          %168 = sbr.rel (%p166) target = $region32
        $region31: #{tpu_custom_call.1} parent=27 // pred_region
          %169 = dma.done [#allocation3], 256
        $region32: #{tpu_custom_call.1} parent=27 // pred_fallthru
          _
        %s170 = sand.u32 %s63, 1
        %s171 = scalar_lea.sflag [#allocation6], %s170
        %s172 = sand.u32 %s63, 1
        %s173 = smul.addr %s172, 32
        %s174 = scalar_lea.vmem [#allocation5], %s173
        // Predicated region
        $region33: #{tpu_custom_call.1} parent=27 // pred_check
          %p175 = pneg %p76
        $region34: #{tpu_custom_call.1} parent=27 // pred_check_branch
          %177 = sbr.rel (%p175) target = $region36
        $region35: #{tpu_custom_call.1} parent=27 // pred_region
          %178 = dma.done %s171, 512
        $region36: #{tpu_custom_call.1} parent=27 // pred_fallthru
          _
        %p179 = pneg %p48
        %p180 = pneg %p45
        %s181 = sand.u32 %s63, 1
        %s182 = scalar_lea.sflag [#allocation6], %s181
        %s183 = sand.u32 %s63, 1
        %s184 = smul.addr %s183, 32
        %s185 = scalar_lea.vmem [#allocation5], %s184
        %p186 = pneg %p76
        %p187 = pneg %p73
        %p188 = pneg %p104
        %p189 = pneg %p101
        %s190 = sand.u32 %s91, 1
        %s191 = scalar_lea.sflag [#allocation4], %s190
        %s192 = sand.u32 %s91, 1
        %s193 = smul.addr %s192, 32
        %s194 = scalar_lea.vmem [#allocation7], %s193
        %s195 = smul.u32 2, %s24
        %s196 = smul.u32 2, %s24
        %v197 = vld [vmem:[#allocation2] sm:$0xff]
        %v198 = vld [vmem:[#allocation2 + $0x8] sm:$0xff]
        %v199 = vld [vmem:[%s174] sm:$0xff]
        %v200 = vld [vmem:[%s174 + $0x8] sm:$0xff]
        %vm201 = vcmask 130048
        %v203 = vsel %vm201, %v197, 0
        %v206 = vsel %vm201, %v198, 0
        %208 = vmatprep.subr.mxu0 0.0
        %209 = vmatpush1.msra.mxu0 %v199
        %210 = vmatprep.subr.mxu0 0.0
        %211 = vmatpush1.msra.mxu0 %v200
        %212 = vmatprep.subr.mxu0 0.0
        %213 = vmatpush1.msra.mxu0 0.0
        %214 = vmatprep.subr.mxu0 0.0
        %215 = vmatpush1.msra.mxu0 0.0
        %216 = vmatprep.subr.mxu0 0.0
        %217 = vmatpush1.msra.mxu0 0.0
        %218 = vmatprep.subr.mxu0 0.0
        %219 = vmatpush1.msra.mxu0 0.0
        %220 = vmatprep.subr.mxu0 0.0
        %221 = vmatpush1.msra.mxu0 0.0
        %222 = vmatprep.subr.mxu0 0.0
        %223 = vmatpush1.msra.mxu0 0.0
        %224 = vmatprep.subr.mxu0 0.0
        %225 = vmatpush1.msra.mxu0 0.0
        %226 = vmatprep.subr.mxu0 0.0
        %227 = vmatpush1.msra.mxu0 0.0
        %228 = vmatprep.subr.mxu0 0.0
        %229 = vmatpush1.msra.mxu0 0.0
        %230 = vmatprep.subr.mxu0 0.0
        %231 = vmatpush1.msra.mxu0 0.0
        %232 = vmatprep.subr.mxu0 0.0
        %233 = vmatpush1.msra.mxu0 0.0
        %234 = vmatprep.subr.mxu0 0.0
        %235 = vmatpush1.msra.mxu0 0.0
        %236 = vmatprep.subr.mxu0 0.0
        %237 = vmatpush1.msra.mxu0 0.0
        %238 = vmatprep.subr.mxu0 0.0
        %239 = vmatpush1.msra.mxu0 0.0
        %240 = vmatprep.subr.mxu0 0.0
        %241 = vmatpush1.msra.mxu0 0.0
        %242 = vmatprep.subr.mxu0 0.0
        %243 = vmatpush1.msra.mxu0 0.0
        %244 = vmatprep.subr.mxu0 0.0
        %245 = vmatpush1.msra.mxu0 0.0
        %246 = vmatprep.subr.mxu0 0.0
        %247 = vmatpush1.msra.mxu0 0.0
        %248 = vmatprep.subr.mxu0 0.0
        %249 = vmatpush1.msra.mxu0 0.0
        %250 = vmatprep.subr.mxu0 0.0
        %251 = vmatpush1.msra.mxu0 0.0
        %252 = vmatprep.subr.mxu0 0.0
        %253 = vmatpush1.msra.mxu0 0.0
        %254 = vmatprep.subr.mxu0 0.0
        %255 = vmatpush1.msra.mxu0 0.0
        %256 = vmatprep.subr.mxu0 0.0
        %257 = vmatpush1.msra.mxu0 0.0
        %258 = vmatprep.subr.mxu0 0.0
        %259 = vmatpush1.msra.mxu0 0.0
        %260 = vmatprep.subr.mxu0 0.0
        %261 = vmatpush1.msra.mxu0 0.0
        %262 = vmatprep.subr.mxu0 0.0
        %263 = vmatpush1.msra.mxu0 0.0
        %264 = vmatprep.subr.mxu0 0.0
        %265 = vmatpush1.msra.mxu0 0.0
        %266 = vmatprep.subr.mxu0 0.0
        %267 = vmatpush1.msra.mxu0 0.0
        %268 = vmatprep.subr.mxu0 0.0
        %269 = vmatpush1.msra.mxu0 0.0
        %270 = vmatprep.subr.mxu0 0.0
        %271 = vmatpush1.msra.mxu0 0.0
        %272 = vmatprep.mubr.f32.mxu0 0.0
        %273 = vmatmul.mubr.f32.gmra.mrb[0].mxu0 %v203
        %v274 = vpop.f32.mrb[0].mxu0
        %v275 = vadd.f32 0.0, %v274
        %v276 = vpop.f32.mrb[0].mxu0
        %277 = vmatprep.mubr.f32.mxu0 0.0
        %278 = vmatmul.mubr.f32.gmra.mrb[0].mxu0 %v206
        %v279 = vpop.f32.mrb[0].mxu0
        %v280 = vadd.f32 0.0, %v279
        %v281 = vpop.f32.mrb[0].mxu0
        %282 = vdwg.mxu0
        %283 = vst.msk [vmem:[%s194] sm:$0xff] %vm201, %v275
        %284 = vst.msk [vmem:[%s194 + $0x8] sm:$0xff] %vm201, %v280
        %s285 = scalar_lea.vmem %s174, 16 [#allocation5]
        %v286 = vld [vmem:[%s285] sm:$0xff]
        %v287 = vld [vmem:[%s285 + $0x8] sm:$0xff]
        %288 = vmatprep.subr.mxu0 0.0
        %289 = vmatpush1.msra.mxu0 %v286
        %290 = vmatprep.subr.mxu0 0.0
        %291 = vmatpush1.msra.mxu0 %v287
        %292 = vmatprep.subr.mxu0 0.0
        %293 = vmatpush1.msra.mxu0 0.0
        %294 = vmatprep.subr.mxu0 0.0
        %295 = vmatpush1.msra.mxu0 0.0
        %296 = vmatprep.subr.mxu0 0.0
        %297 = vmatpush1.msra.mxu0 0.0
        %298 = vmatprep.subr.mxu0 0.0
        %299 = vmatpush1.msra.mxu0 0.0
        %300 = vmatprep.subr.mxu0 0.0
        %301 = vmatpush1.msra.mxu0 0.0
        %302 = vmatprep.subr.mxu0 0.0
        %303 = vmatpush1.msra.mxu0 0.0
        %304 = vmatprep.subr.mxu0 0.0
        %305 = vmatpush1.msra.mxu0 0.0
        %306 = vmatprep.subr.mxu0 0.0
        %307 = vmatpush1.msra.mxu0 0.0
        %308 = vmatprep.subr.mxu0 0.0
        %309 = vmatpush1.msra.mxu0 0.0
        %310 = vmatprep.subr.mxu0 0.0
        %311 = vmatpush1.msra.mxu0 0.0
        %312 = vmatprep.subr.mxu0 0.0
        %313 = vmatpush1.msra.mxu0 0.0
        %314 = vmatprep.subr.mxu0 0.0
        %315 = vmatpush1.msra.mxu0 0.0
        %316 = vmatprep.subr.mxu0 0.0
        %317 = vmatpush1.msra.mxu0 0.0
        %318 = vmatprep.subr.mxu0 0.0
        %319 = vmatpush1.msra.mxu0 0.0
        %320 = vmatprep.subr.mxu0 0.0
        %321 = vmatpush1.msra.mxu0 0.0
        %322 = vmatprep.subr.mxu0 0.0
        %323 = vmatpush1.msra.mxu0 0.0
        %324 = vmatprep.subr.mxu0 0.0
        %325 = vmatpush1.msra.mxu0 0.0
        %326 = vmatprep.subr.mxu0 0.0
        %327 = vmatpush1.msra.mxu0 0.0
        %328 = vmatprep.subr.mxu0 0.0
        %329 = vmatpush1.msra.mxu0 0.0
        %330 = vmatprep.subr.mxu0 0.0
        %331 = vmatpush1.msra.mxu0 0.0
        %332 = vmatprep.subr.mxu0 0.0
        %333 = vmatpush1.msra.mxu0 0.0
        %334 = vmatprep.subr.mxu0 0.0
        %335 = vmatpush1.msra.mxu0 0.0
        %336 = vmatprep.subr.mxu0 0.0
        %337 = vmatpush1.msra.mxu0 0.0
        %338 = vmatprep.subr.mxu0 0.0
        %339 = vmatpush1.msra.mxu0 0.0
        %340 = vmatprep.subr.mxu0 0.0
        %341 = vmatpush1.msra.mxu0 0.0
        %342 = vmatprep.subr.mxu0 0.0
        %343 = vmatpush1.msra.mxu0 0.0
        %344 = vmatprep.subr.mxu0 0.0
        %345 = vmatpush1.msra.mxu0 0.0
        %346 = vmatprep.subr.mxu0 0.0
        %347 = vmatpush1.msra.mxu0 0.0
        %348 = vmatprep.subr.mxu0 0.0
        %349 = vmatpush1.msra.mxu0 0.0
        %350 = vmatprep.subr.mxu0 0.0
        %351 = vmatpush1.msra.mxu0 0.0
        %352 = vmatprep.mubr.f32.mxu0 0.0
        %353 = vmatmul.mubr.f32.gmra.mrb[0].mxu0 %v203
        %v354 = vpop.f32.mrb[0].mxu0
        %v355 = vadd.f32 0.0, %v354
        %v356 = vpop.f32.mrb[0].mxu0
        %357 = vmatprep.mubr.f32.mxu0 0.0
        %358 = vmatmul.mubr.f32.gmra.mrb[0].mxu0 %v206
        %v359 = vpop.f32.mrb[0].mxu0
        %v360 = vadd.f32 0.0, %v359
        %v361 = vpop.f32.mrb[0].mxu0
        %362 = vdwg.mxu0
        %s363 = scalar_lea.vmem %s194, 16 [#allocation7]
        %364 = vst.msk [vmem:[%s363] sm:$0xff] %vm201, %v355
        %365 = vst.msk [vmem:[%s363 + $0x8] sm:$0xff] %vm201, %v360
        %s366 = sand.u32 %s91, 1
        %s367 = scalar_lea.sflag [#allocation4], %s366
        %s368 = sand.u32 %s91, 1
        %s369 = smul.addr %s368, 32
        %s370 = scalar_lea.vmem [#allocation7], %s369
        // Predicated region
        $region37: #{tpu_custom_call.1} parent=27 // pred_check
          %p371 = pneg %p101
        $region38: #{tpu_custom_call.1} parent=27 // pred_check_branch
          %373 = sbr.rel (%p371) target = $region40
        $region39: #{tpu_custom_call.1} parent=27 // pred_region
          %s374 = smul.u32 2, %s24
          %s376 = ssub.s32 512, 512
          %377 = vsyncadd %s367, %s376
          %s378 = smul.addr %s374, 2
          %s379 = sadd.s32 %s25, %s378
          %s380 = smul.addr %s379, 128
          %s381 = scalar_lea.hbm %s2, %s380
          %s382 = sshll.u32 %s370, 4
          %s383 = int_to_ptr.vmem [resolvable:$true] %s382
          %388 = dma.vmem_to_hbm [thread:$0]  %s383, 512, %s381, %s367, 128, 128, 8
        $region40: #{tpu_custom_call.1} parent=27 // pred_fallthru
          _
      $region28: #{tpu_custom_call.1} parent=5 // pred_fallthru
        _
      %p389 = scmp.le.s32.totalorder 2, %s15
      // Predicated region
      $region41: #{tpu_custom_call.1} parent=5 // pred_check
        %p390 = pneg %p389
      $region42: #{tpu_custom_call.1} parent=5 // pred_check_branch
        %392 = sbr.rel (%p390) target = $region44
      $region43: #{tpu_custom_call.1} parent=5 // pred_region
        %s393 = ssub.s32 %s15, 2
        // Predicated region
        $region45: #{tpu_custom_call.1} parent=43 // pred_check
          %p394 = pneg %p107
        $region46: #{tpu_custom_call.1} parent=43 // pred_check_branch
          %396 = sbr.rel (%p394) target = $region48
        $region47: #{tpu_custom_call.1} parent=43 // pred_region
          %s397 = sand.u32 %s92, 1
          %s398 = scalar_lea.sflag [#allocation4], %s397
          %s399 = sand.u32 %s92, 1
          %s400 = smul.addr %s399, 32
          %s401 = scalar_lea.vmem [#allocation7], %s400
          %402 = dma.done %s398, 512
        $region48: #{tpu_custom_call.1} parent=43 // pred_fallthru
          _
      $region44: #{tpu_custom_call.1} parent=5 // pred_fallthru
        _
    $region6: #{tpu_custom_call.1} parent=1 // loop_footer
      %s19 = sadd.s32 1, %s15
    $region7: #{tpu_custom_call.1} parent=1 // loop_footer_branch
      %14 = sbr.rel target = $region3
    $region8: #{tpu_custom_call.1} parent=1 // loop_exit
      _
    %403 = vsyncpa [#allocation3], 1
    %s404 = scalar_lea.sflag [#allocation3], 1
    %405 = vsyncpa %s404, 1
    %406 = vsyncpa [#allocation6], 1
    %s407 = scalar_lea.sflag [#allocation6], 1
    %408 = vsyncpa %s407, 1
    %409 = vsyncpa [#allocation4], 1
    %s410 = scalar_lea.sflag [#allocation4], 1
    %411 = vsyncpa %s410, 1

</llo_original>
